<compile_context>
chip_gen: v7x
topology: tpu7x:2x2x1
jax: 0.10.0
libtpu: 0.0.40
codegen_flags: <defaults>
</compile_context>

<pallas_src>
import jax
import jax.numpy as jnp
from jax import lax
from jax.experimental import pallas as pl
from jax.experimental.pallas import tpu as pltpu


def cross_attention_kernel(q_ref, k_ref, v_ref,
                           wq_ref, bq_ref, wk_ref, bk_ref, wv_ref, bv_ref,
                           o_ref):
    TB, Sq, D = q_ref.shape
    _, Sk, _ = k_ref.shape

    # Fold the batch block into the row dim: one large 2-D MXU matmul per
    # projection (merging leading dims keeps the lane dim (D) untouched, so
    # this reshape is a cheap sublane re-view, not a relayout).
    q2 = q_ref[...].reshape(TB * Sq, D)
    k2 = k_ref[...].reshape(TB * Sk, D)
    v2 = v_ref[...].reshape(TB * Sk, D)

    Q = (jnp.dot(q2, wq_ref[...], preferred_element_type=jnp.float32)
         + bq_ref[...]).reshape(TB, Sq, D)
    K = (jnp.dot(k2, wk_ref[...], preferred_element_type=jnp.float32)
         + bk_ref[...]).reshape(TB, Sk, D)
    V = (jnp.dot(v2, wv_ref[...], preferred_element_type=jnp.float32)
         + bv_ref[...]).reshape(TB, Sk, D)

    # Batched scores, contracting the D axes: (TB, Sq, Sk) in f32, no explicit
    # transpose of K.
    scores = lax.dot_general(
        Q, K, (((2,), (2,)), ((0,), (0,))),
        preferred_element_type=jnp.float32)

    # Numerically-stable softmax along the key axis (kept in f32).
    m = jnp.max(scores, axis=-1, keepdims=True)
    e = jnp.exp(scores - m)
    denom = jnp.sum(e, axis=-1, keepdims=True)
    attn = e * pl.reciprocal(denom, approx=True)       # EUP vrcp, ~free slot

    # attended = attn @ V  (batched, f32 accumulation on the MXU).
    out = lax.dot_general(
        attn.astype(v_ref.dtype), V.astype(v_ref.dtype),
        (((2,), (1,)), ((0,), (0,))),
        preferred_element_type=jnp.float32)            # (TB, Sq, D)

    o_ref[...] = out.astype(o_ref.dtype)


def _pick_batch_block(B, Sq, target_rows=256):
    """Smallest divisor of B whose folded row count reaches an MXU-friendly
    tile; otherwise all of B (fewer grid steps -> less per-step overhead)."""
    for tb in range(1, B + 1):
        if B % tb == 0 and tb * Sq >= target_rows:
            return tb
    return B


def cross_attention(query, key, value, wq, bq, wk, bk, wv, bv):
    """query: (B, Sq, D); key/value: (B, Sk, D); w*: (D, D) pre-transposed
    (i.e. torch_weight.T); b*: (D,).  Returns (B, Sq, D)."""
    B, Sq, D = query.shape
    _, Sk, _ = key.shape
    TB = _pick_batch_block(B, Sq)

    q_spec = pl.BlockSpec((TB, Sq, D), lambda b: (b, 0, 0))
    kv_spec = pl.BlockSpec((TB, Sk, D), lambda b: (b, 0, 0))
    w_spec = pl.BlockSpec((D, D), lambda b: (0, 0))       # resident across grid
    b_spec = pl.BlockSpec((1, D), lambda b: (0, 0))

    flops = 2 * B * (Sq * D * D + 2 * Sk * D * D + 2 * Sq * Sk * D)
    itemsize = jnp.dtype(query.dtype).itemsize
    bytes_accessed = (itemsize * (2 * B * Sq * D + 2 * B * Sk * D)
                      + 4 * (3 * D * D + 3 * D))

    return pl.pallas_call(
        cross_attention_kernel,
        out_shape=jax.ShapeDtypeStruct((B, Sq, D), query.dtype),
        grid=(B // TB,),
        in_specs=[q_spec, kv_spec, kv_spec,
                  w_spec, b_spec, w_spec, b_spec, w_spec, b_spec],
        out_specs=q_spec,
        compiler_params=pltpu.CompilerParams(
            dimension_semantics=("parallel",)),
        cost_estimate=pl.CostEstimate(
            flops=flops,
            transcendentals=B * Sq * Sk,
            bytes_accessed=bytes_accessed),
    )(query, key, value,
      wq, bq.reshape(1, D), wk, bk.reshape(1, D), wv, bv.reshape(1, D))


def cross_attention_ref(query, key, value, wq, bq, wk, bk, wv, bv):
    Q = jnp.einsum("bsd,de->bse", query, wq) + bq
    K = jnp.einsum("bsd,de->bse", key, wk) + bk
    V = jnp.einsum("bsd,de->bse", value, wv) + bv
    scores = jnp.einsum("bqd,bkd->bqk", Q, K)   # no 1/sqrt(D), as in the module
    attn = jax.nn.softmax(scores, axis=-1)
    return jnp.einsum("bqk,bkd->bqd", attn, V)


if __name__ == "__main__":
    B, Sq, Sk, D = 2, 8, 8, 32
    key0 = jax.random.PRNGKey(0)
    ks = jax.random.split(key0, 9)

    # Deterministic synthetic parameters matching nn.Linear(D, D) init ranges.
    # Weights stored pre-transposed as (D_in, D_out).
    scale = 1.0 / jnp.sqrt(jnp.float32(D))
    wq = jax.random.uniform(ks[0], (D, D), jnp.float32, -scale, scale)
    bq = jax.random.uniform(ks[1], (D,), jnp.float32, -scale, scale)
    wk = jax.random.uniform(ks[2], (D, D), jnp.float32, -scale, scale)
    bk = jax.random.uniform(ks[3], (D,), jnp.float32, -scale, scale)
    wv = jax.random.uniform(ks[4], (D, D), jnp.float32, -scale, scale)
    bv = jax.random.uniform(ks[5], (D,), jnp.float32, -scale, scale)

    query = jax.random.normal(ks[6], (B, Sq, D), jnp.float32)
    key_t = jax.random.normal(ks[7], (B, Sk, D), jnp.float32)
    value = jax.random.normal(ks[8], (B, Sk, D), jnp.float32)

    out = cross_attention(query, key_t, value, wq, bq, wk, bk, wv, bv)
    out = jax.block_until_ready(out)

    ref = cross_attention_ref(query, key_t, value, wq, bq, wk, bk, wv, bv)
    assert out.shape == (B, Sq, D)
    # Tolerance loosened slightly vs exact f32 because the softmax denominator
    # uses the hardware approximate reciprocal (pl.reciprocal(approx=True)).
    assert jnp.allclose(out, ref, atol=5e-3, rtol=5e-3), "mismatch vs reference"

    print("KERNEL_OK")
</pallas_src>

<mosaic_0001>
module attributes {stable_mosaic.version = 11 : i64} {
  func.func @cross_attention_kernel(%arg0: i32, %arg1: memref<2x8x32xf32, #tpu.memory_space<vmem>>, %arg2: memref<2x8x32xf32, #tpu.memory_space<vmem>>, %arg3: memref<2x8x32xf32, #tpu.memory_space<vmem>>, %arg4: memref<32x32xf32, #tpu.memory_space<vmem>>, %arg5: memref<1x32xf32, #tpu.memory_space<vmem>>, %arg6: memref<32x32xf32, #tpu.memory_space<vmem>>, %arg7: memref<1x32xf32, #tpu.memory_space<vmem>>, %arg8: memref<32x32xf32, #tpu.memory_space<vmem>>, %arg9: memref<1x32xf32, #tpu.memory_space<vmem>>, %arg10: memref<2x8x32xf32, #tpu.memory_space<vmem>>) attributes {dimension_semantics = [#tpu.dimension_semantics<parallel>], iteration_bounds = array<i64: 1>, scalar_prefetch = 0 : i64, scratch_operands = 0 : i64, tpu.core_type = #tpu.core_type<tc>, window_params = [{transform_indices = @transform_0, window_bounds = array<i64: 2, 8, 32>}, {transform_indices = @transform_1, window_bounds = array<i64: 2, 8, 32>}, {transform_indices = @transform_2, window_bounds = array<i64: 2, 8, 32>}, {pipeline_mode = #tpu.pipeline_mode<synchronous>, transform_indices = @transform_3, window_bounds = array<i64: 32, 32>}, {pipeline_mode = #tpu.pipeline_mode<synchronous>, transform_indices = @transform_4, window_bounds = array<i64: 1, 32>}, {pipeline_mode = #tpu.pipeline_mode<synchronous>, transform_indices = @transform_5, window_bounds = array<i64: 32, 32>}, {pipeline_mode = #tpu.pipeline_mode<synchronous>, transform_indices = @transform_6, window_bounds = array<i64: 1, 32>}, {pipeline_mode = #tpu.pipeline_mode<synchronous>, transform_indices = @transform_7, window_bounds = array<i64: 32, 32>}, {pipeline_mode = #tpu.pipeline_mode<synchronous>, transform_indices = @transform_8, window_bounds = array<i64: 1, 32>}, {transform_indices = @transform_9, window_bounds = array<i64: 2, 8, 32>}]} {
    %c0 = arith.constant 0 : index
    %c0_0 = arith.constant 0 : index
    %c0_1 = arith.constant 0 : index
    %0 = vector.load %arg1[%c0, %c0_0, %c0_1] : memref<2x8x32xf32, #tpu.memory_space<vmem>>, vector<2x8x32xf32>
    %1 = vector.shape_cast %0 : vector<2x8x32xf32> to vector<16x32xf32>
    %c0_2 = arith.constant 0 : index
    %c0_3 = arith.constant 0 : index
    %c0_4 = arith.constant 0 : index
    %2 = vector.load %arg2[%c0_2, %c0_3, %c0_4] : memref<2x8x32xf32, #tpu.memory_space<vmem>>, vector<2x8x32xf32>
    %3 = vector.shape_cast %2 : vector<2x8x32xf32> to vector<16x32xf32>
    %c0_5 = arith.constant 0 : index
    %c0_6 = arith.constant 0 : index
    %c0_7 = arith.constant 0 : index
    %4 = vector.load %arg3[%c0_5, %c0_6, %c0_7] : memref<2x8x32xf32, #tpu.memory_space<vmem>>, vector<2x8x32xf32>
    %5 = vector.shape_cast %4 : vector<2x8x32xf32> to vector<16x32xf32>
    %c0_8 = arith.constant 0 : index
    %c0_9 = arith.constant 0 : index
    %6 = vector.load %arg4[%c0_8, %c0_9] : memref<32x32xf32, #tpu.memory_space<vmem>>, vector<32x32xf32>
    %cst = arith.constant dense<0.000000e+00> : vector<16x32xf32>
    %7 = tpu.matmul %1, %6, %cst {dimension_numbers = #tpu.dot_dimension_numbers<[1], [0], [0], [1], [0, 0, 1, 1], [], []>} : vector<16x32xf32>, vector<32x32xf32>, vector<16x32xf32> -> vector<16x32xf32>
    %c0_10 = arith.constant 0 : index
    %c0_11 = arith.constant 0 : index
    %8 = vector.load %arg5[%c0_10, %c0_11] : memref<1x32xf32, #tpu.memory_space<vmem>>, vector<1x32xf32>
    %9 = vector.broadcast %8 : vector<1x32xf32> to vector<16x32xf32>
    %10 = arith.addf %7, %9 : vector<16x32xf32>
    %11 = vector.shape_cast %10 : vector<16x32xf32> to vector<2x8x32xf32>
    %c0_12 = arith.constant 0 : index
    %c0_13 = arith.constant 0 : index
    %12 = vector.load %arg6[%c0_12, %c0_13] : memref<32x32xf32, #tpu.memory_space<vmem>>, vector<32x32xf32>
    %cst_14 = arith.constant dense<0.000000e+00> : vector<16x32xf32>
    %13 = tpu.matmul %3, %12, %cst_14 {dimension_numbers = #tpu.dot_dimension_numbers<[1], [0], [0], [1], [0, 0, 1, 1], [], []>} : vector<16x32xf32>, vector<32x32xf32>, vector<16x32xf32> -> vector<16x32xf32>
    %c0_15 = arith.constant 0 : index
    %c0_16 = arith.constant 0 : index
    %14 = vector.load %arg7[%c0_15, %c0_16] : memref<1x32xf32, #tpu.memory_space<vmem>>, vector<1x32xf32>
    %15 = vector.broadcast %14 : vector<1x32xf32> to vector<16x32xf32>
    %16 = arith.addf %13, %15 : vector<16x32xf32>
    %17 = vector.shape_cast %16 : vector<16x32xf32> to vector<2x8x32xf32>
    %c0_17 = arith.constant 0 : index
    %c0_18 = arith.constant 0 : index
    %18 = vector.load %arg8[%c0_17, %c0_18] : memref<32x32xf32, #tpu.memory_space<vmem>>, vector<32x32xf32>
    %cst_19 = arith.constant dense<0.000000e+00> : vector<16x32xf32>
    %19 = tpu.matmul %5, %18, %cst_19 {dimension_numbers = #tpu.dot_dimension_numbers<[1], [0], [0], [1], [0, 0, 1, 1], [], []>} : vector<16x32xf32>, vector<32x32xf32>, vector<16x32xf32> -> vector<16x32xf32>
    %c0_20 = arith.constant 0 : index
    %c0_21 = arith.constant 0 : index
    %20 = vector.load %arg9[%c0_20, %c0_21] : memref<1x32xf32, #tpu.memory_space<vmem>>, vector<1x32xf32>
    %21 = vector.broadcast %20 : vector<1x32xf32> to vector<16x32xf32>
    %22 = arith.addf %19, %21 : vector<16x32xf32>
    %23 = vector.shape_cast %22 : vector<16x32xf32> to vector<2x8x32xf32>
    %cst_22 = arith.constant dense<0.000000e+00> : vector<2x8x8xf32>
    %24 = tpu.matmul %11, %17, %cst_22 {dimension_numbers = #tpu.dot_dimension_numbers<[2], [2], [1], [1], [0, 0, 0, 1, 1, 1], [0], [0]>} : vector<2x8x32xf32>, vector<2x8x32xf32>, vector<2x8x8xf32> -> vector<2x8x8xf32>
    %cst_23 = arith.constant dense<0xFF800000> : vector<2x8xf32>
    %25 = vector.multi_reduction <maximumf>, %24, %cst_23 [2] : vector<2x8x8xf32> to vector<2x8xf32>
    %26 = vector.shape_cast %25 : vector<2x8xf32> to vector<2x8x1xf32>
    %27 = vector.broadcast %26 : vector<2x8x1xf32> to vector<2x8x8xf32>
    %28 = arith.subf %24, %27 : vector<2x8x8xf32>
    %29 = math.exp %28 : vector<2x8x8xf32>
    %cst_24 = arith.constant dense<0.000000e+00> : vector<2x8xf32>
    %30 = vector.multi_reduction <add>, %29, %cst_24 [2] : vector<2x8x8xf32> to vector<2x8xf32>
    %31 = vector.shape_cast %30 : vector<2x8xf32> to vector<2x8x1xf32>
    %32 = tpu.reciprocal %31 {approx = true} : vector<2x8x1xf32> -> vector<2x8x1xf32>
    %33 = vector.broadcast %32 : vector<2x8x1xf32> to vector<2x8x8xf32>
    %34 = arith.mulf %29, %33 : vector<2x8x8xf32>
    %cst_25 = arith.constant dense<0.000000e+00> : vector<2x8x32xf32>
    %35 = tpu.matmul %34, %23, %cst_25 {dimension_numbers = #tpu.dot_dimension_numbers<[2], [1], [1], [2], [0, 0, 0, 1, 1, 2], [0], [0]>} : vector<2x8x8xf32>, vector<2x8x32xf32>, vector<2x8x32xf32> -> vector<2x8x32xf32>
    %c0_26 = arith.constant 0 : index
    %c0_27 = arith.constant 0 : index
    %c0_28 = arith.constant 0 : index
    %36 = vector.load %arg10[%c0_26, %c0_27, %c0_28] : memref<2x8x32xf32, #tpu.memory_space<vmem>>, vector<2x8x32xf32>
    tpu.vector_store %arg10[%c0_26, %c0_27, %c0_28], %35 {strides = array<i32>} : memref<2x8x32xf32, #tpu.memory_space<vmem>>, vector<2x8x32xf32>,
    return
  }
  func.func @transform_0(%arg0: i32) -> (i32, i32, i32) {
    %c0_i32 = arith.constant 0 : i32
    %c0_i32_0 = arith.constant 0 : i32
    %c0_i32_1 = arith.constant 0 : i32
    return %arg0, %c0_i32, %c0_i32_0 : i32, i32, i32
  }
  func.func @transform_1(%arg0: i32) -> (i32, i32, i32) {
    %c0_i32 = arith.constant 0 : i32
    %c0_i32_0 = arith.constant 0 : i32
    %c0_i32_1 = arith.constant 0 : i32
    return %arg0, %c0_i32, %c0_i32_0 : i32, i32, i32
  }
  func.func @transform_2(%arg0: i32) -> (i32, i32, i32) {
    %c0_i32 = arith.constant 0 : i32
    %c0_i32_0 = arith.constant 0 : i32
    %c0_i32_1 = arith.constant 0 : i32
    return %arg0, %c0_i32, %c0_i32_0 : i32, i32, i32
  }
  func.func @transform_3(%arg0: i32) -> (i32, i32) {
    %c0_i32 = arith.constant 0 : i32
    %c0_i32_0 = arith.constant 0 : i32
    %c0_i32_1 = arith.constant 0 : i32
    return %c0_i32, %c0_i32_0 : i32, i32
  }
  func.func @transform_4(%arg0: i32) -> (i32, i32) {
    %c0_i32 = arith.constant 0 : i32
    %c0_i32_0 = arith.constant 0 : i32
    %c0_i32_1 = arith.constant 0 : i32
    return %c0_i32, %c0_i32_0 : i32, i32
  }
  func.func @transform_5(%arg0: i32) -> (i32, i32) {
    %c0_i32 = arith.constant 0 : i32
    %c0_i32_0 = arith.constant 0 : i32
    %c0_i32_1 = arith.constant 0 : i32
    return %c0_i32, %c0_i32_0 : i32, i32
  }
  func.func @transform_6(%arg0: i32) -> (i32, i32) {
    %c0_i32 = arith.constant 0 : i32
    %c0_i32_0 = arith.constant 0 : i32
    %c0_i32_1 = arith.constant 0 : i32
    return %c0_i32, %c0_i32_0 : i32, i32
  }
  func.func @transform_7(%arg0: i32) -> (i32, i32) {
    %c0_i32 = arith.constant 0 : i32
    %c0_i32_0 = arith.constant 0 : i32
    %c0_i32_1 = arith.constant 0 : i32
    return %c0_i32, %c0_i32_0 : i32, i32
  }
  func.func @transform_8(%arg0: i32) -> (i32, i32) {
    %c0_i32 = arith.constant 0 : i32
    %c0_i32_0 = arith.constant 0 : i32
    %c0_i32_1 = arith.constant 0 : i32
    return %c0_i32, %c0_i32_0 : i32, i32
  }
  func.func @transform_9(%arg0: i32) -> (i32, i32, i32) {
    %c0_i32 = arith.constant 0 : i32
    %c0_i32_0 = arith.constant 0 : i32
    %c0_i32_1 = arith.constant 0 : i32
    return %arg0, %c0_i32, %c0_i32_0 : i32, i32, i32
  }
}

</mosaic_0001>

<llo_original>
// kernel: tpu_custom_call.1
$region0: #{tpu_custom_call.1}
  #allocation0 [shape = 'u32[]', space=smem, size = 0x4, offset = 0x4, fixed_abs, tag = 'smem constant byte address 0x4 - core index']
  #allocation1 [shape = 'u32[144,128]{1,0:T(1,128)}', space=vmem, size = 0x12000, scoped, tag = 'internal scratch']
  %s0 = inlined_call_operand.hbm [shape: f32[2,8,32], index: 0, kind: input, shape index: {}]
  %s1 = inlined_call_operand.hbm [shape: f32[2,8,32], index: 1, kind: input, shape index: {}]
  %s2 = inlined_call_operand.hbm [shape: f32[2,8,32], index: 2, kind: input, shape index: {}]
  %s3 = inlined_call_operand.hbm [shape: f32[32,32], index: 3, kind: input, shape index: {}]
  %s4 = inlined_call_operand.vmem [shape: f32[1,32], index: 4, kind: input, shape index: {}]
  %s5 = inlined_call_operand.hbm [shape: f32[32,32], index: 5, kind: input, shape index: {}]
  %s6 = inlined_call_operand.vmem [shape: f32[1,32], index: 6, kind: input, shape index: {}]
  %s7 = inlined_call_operand.hbm [shape: f32[32,32], index: 7, kind: input, shape index: {}]
  %s8 = inlined_call_operand.vmem [shape: f32[1,32], index: 8, kind: input, shape index: {}]
  %s9 = inlined_call_operand.hbm [shape: f32[2,8,32], index: 9, kind: output, shape index: {}]
  %s10 = sld [smem:[#allocation0]]
  $region70: #{tpu_custom_call.1} parent=0
    _
  %s12 = ssub.s32 1, %s10
  %s13 = scalar_select 0, %s12, %s10
  $region1: #{tpu_custom_call.1} parent=0
    #allocation2 [shape = 'u8[8192]{0}', space=vmem, size = 0x2000, scoped, tag = 'input window, operand 0, single buffered']
    #allocation3 [shape = 's32[1]{0}', space=sflag, size = 0x4, scoped, tag = 'scoped memory for tpu_custom_call.1']
    #allocation4 [shape = 's32[1]{0}', space=sflag, size = 0x4, scoped, tag = 'scoped memory for tpu_custom_call.1']
    #allocation5 [shape = 'u8[8192]{0}', space=vmem, size = 0x2000, scoped, tag = 'input window, operand 1, single buffered']
    #allocation6 [shape = 's32[1]{0}', space=sflag, size = 0x4, scoped, tag = 'scoped memory for tpu_custom_call.1']
    #allocation7 [shape = 'u8[8192]{0}', space=vmem, size = 0x2000, scoped, tag = 'input window, operand 2, single buffered']
    #allocation8 [shape = 'u8[16384]{0}', space=vmem, size = 0x4000, scoped, tag = 'input window, operand 3, single buffered']
    #allocation9 [shape = 's32[1]{0}', space=sflag, size = 0x4, scoped, tag = 'scoped memory for tpu_custom_call.1']
    #allocation10 [shape = 'u8[16384]{0}', space=vmem, size = 0x4000, scoped, tag = 'input window, operand 5, single buffered']
    #allocation11 [shape = 'u8[16384]{0}', space=vmem, size = 0x4000, scoped, tag = 'input window, operand 7, single buffered']
    #allocation12 [shape = 's32[1]{0}', space=sflag, size = 0x4, scoped, tag = 'scoped memory for tpu_custom_call.1']
    #allocation13 [shape = 'u8[8192]{0}', space=vmem, size = 0x2000, scoped, tag = 'output window, operand 0, single buffered']
    %14 = vsyncpa [#allocation3], 0
    %15 = vsyncpa [#allocation6], 0
    %16 = vsyncpa [#allocation9], 0
    %17 = vsyncpa [#allocation12], 0
    %18 = vsyncpa [#allocation4], 0
    // Predicated region
    $region2: #{tpu_custom_call.1} parent=1 // pred_check
      _
    $region3: #{tpu_custom_call.1} parent=1 // pred_check_branch
      %20 = sbr.rel (0) target = $region5
    $region4: #{tpu_custom_call.1} parent=1 // pred_region
      %s22 = ssub.s32 256, 256
      %23 = vsyncadd [#allocation3], %s22
      %s24 = sshll.u32 [#allocation2], 4
      %s25 = int_to_ptr.vmem [resolvable:$true] %s24
      %30 = dma.hbm_to_vmem [thread:$0]  %s0, 256, %s25, [#allocation3], 128, 128, 8
    $region5: #{tpu_custom_call.1} parent=1 // pred_fallthru
      _
    // Predicated region
    $region6: #{tpu_custom_call.1} parent=1 // pred_check
      _
    $region7: #{tpu_custom_call.1} parent=1 // pred_check_branch
      %32 = sbr.rel (0) target = $region9
    $region8: #{tpu_custom_call.1} parent=1 // pred_region
      %s34 = ssub.s32 256, 256
      %35 = vsyncadd [#allocation6], %s34
      %s36 = sshll.u32 [#allocation5], 4
      %s37 = int_to_ptr.vmem [resolvable:$true] %s36
      %42 = dma.hbm_to_vmem [thread:$0]  %s1, 256, %s37, [#allocation6], 128, 128, 8
    $region9: #{tpu_custom_call.1} parent=1 // pred_fallthru
      _
    // Predicated region
    $region10: #{tpu_custom_call.1} parent=1 // pred_check
      _
    $region11: #{tpu_custom_call.1} parent=1 // pred_check_branch
      %44 = sbr.rel (0) target = $region13
    $region12: #{tpu_custom_call.1} parent=1 // pred_region
      %s46 = ssub.s32 256, 256
      %47 = vsyncadd [#allocation6], %s46
      %s48 = sshll.u32 [#allocation7], 4
      %s49 = int_to_ptr.vmem [resolvable:$true] %s48
      %54 = dma.hbm_to_vmem [thread:$0]  %s2, 256, %s49, [#allocation6], 128, 128, 8
    $region13: #{tpu_custom_call.1} parent=1 // pred_fallthru
      _
    // Predicated region
    $region14: #{tpu_custom_call.1} parent=1 // pred_check
      _
    $region15: #{tpu_custom_call.1} parent=1 // pred_check_branch
      %56 = sbr.rel (0) target = $region17
    $region16: #{tpu_custom_call.1} parent=1 // pred_region
      %s58 = ssub.s32 512, 512
      %59 = vsyncadd [#allocation9], %s58
      %s60 = sshll.u32 [#allocation8], 4
      %s61 = int_to_ptr.vmem [resolvable:$true] %s60
      %66 = dma.hbm_to_vmem [thread:$0]  %s3, 512, %s61, [#allocation9], 128, 128, 8
    $region17: #{tpu_custom_call.1} parent=1 // pred_fallthru
      _
    // Predicated region
    $region18: #{tpu_custom_call.1} parent=1 // pred_check
      _
    $region19: #{tpu_custom_call.1} parent=1 // pred_check_branch
      %68 = sbr.rel (0) target = $region21
    $region20: #{tpu_custom_call.1} parent=1 // pred_region
      _
    $region21: #{tpu_custom_call.1} parent=1 // pred_fallthru
      _
    // Predicated region
    $region22: #{tpu_custom_call.1} parent=1 // pred_check
      _
    $region23: #{tpu_custom_call.1} parent=1 // pred_check_branch
      %70 = sbr.rel (0) target = $region25
    $region24: #{tpu_custom_call.1} parent=1 // pred_region
      %s72 = ssub.s32 512, 512
      %73 = vsyncadd [#allocation9], %s72
      %s74 = sshll.u32 [#allocation10], 4
      %s75 = int_to_ptr.vmem [resolvable:$true] %s74
      %80 = dma.hbm_to_vmem [thread:$0]  %s5, 512, %s75, [#allocation9], 128, 128, 8
    $region25: #{tpu_custom_call.1} parent=1 // pred_fallthru
      _
    // Predicated region
    $region26: #{tpu_custom_call.1} parent=1 // pred_check
      _
    $region27: #{tpu_custom_call.1} parent=1 // pred_check_branch
      %82 = sbr.rel (0) target = $region29
    $region28: #{tpu_custom_call.1} parent=1 // pred_region
      _
    $region29: #{tpu_custom_call.1} parent=1 // pred_fallthru
      _
    // Predicated region
    $region30: #{tpu_custom_call.1} parent=1 // pred_check
      _
    $region31: #{tpu_custom_call.1} parent=1 // pred_check_branch
      %84 = sbr.rel (0) target = $region33
    $region32: #{tpu_custom_call.1} parent=1 // pred_region
      %s86 = ssub.s32 512, 512
      %87 = vsyncadd [#allocation12], %s86
      %s88 = sshll.u32 [#allocation11], 4
      %s89 = int_to_ptr.vmem [resolvable:$true] %s88
      %94 = dma.hbm_to_vmem [thread:$0]  %s7, 512, %s89, [#allocation12], 128, 128, 8
    $region33: #{tpu_custom_call.1} parent=1 // pred_fallthru
      _
    // Predicated region
    $region34: #{tpu_custom_call.1} parent=1 // pred_check
      _
    $region35: #{tpu_custom_call.1} parent=1 // pred_check_branch
      %96 = sbr.rel (0) target = $region37
    $region36: #{tpu_custom_call.1} parent=1 // pred_region
      _
    $region37: #{tpu_custom_call.1} parent=1 // pred_fallthru
      _
    // Predicated region
    $region38: #{tpu_custom_call.1} parent=1 // pred_check
      _
    $region39: #{tpu_custom_call.1} parent=1 // pred_check_branch
      %98 = sbr.rel (0) target = $region41
    $region40: #{tpu_custom_call.1} parent=1 // pred_region
      %99 = dma.done [#allocation3], 256
    $region41: #{tpu_custom_call.1} parent=1 // pred_fallthru
      _
    // Predicated region
    $region42: #{tpu_custom_call.1} parent=1 // pred_check
      _
    $region43: #{tpu_custom_call.1} parent=1 // pred_check_branch
      %101 = sbr.rel (0) target = $region45
    $region44: #{tpu_custom_call.1} parent=1 // pred_region
      %102 = dma.done [#allocation6], 256
    $region45: #{tpu_custom_call.1} parent=1 // pred_fallthru
      _
    // Predicated region
    $region46: #{tpu_custom_call.1} parent=1 // pred_check
      _
    $region47: #{tpu_custom_call.1} parent=1 // pred_check_branch
      %104 = sbr.rel (0) target = $region49
    $region48: #{tpu_custom_call.1} parent=1 // pred_region
      %105 = dma.done [#allocation6], 256
    $region49: #{tpu_custom_call.1} parent=1 // pred_fallthru
      _
    // Predicated region
    $region50: #{tpu_custom_call.1} parent=1 // pred_check
      _
    $region51: #{tpu_custom_call.1} parent=1 // pred_check_branch
      %107 = sbr.rel (0) target = $region53
    $region52: #{tpu_custom_call.1} parent=1 // pred_region
      %108 = dma.done [#allocation9], 512
    $region53: #{tpu_custom_call.1} parent=1 // pred_fallthru
      _
    // Predicated region
    $region54: #{tpu_custom_call.1} parent=1 // pred_check
      _
    $region55: #{tpu_custom_call.1} parent=1 // pred_check_branch
      %110 = sbr.rel (0) target = $region57
    $region56: #{tpu_custom_call.1} parent=1 // pred_region
      %111 = dma.done [#allocation9], 512
    $region57: #{tpu_custom_call.1} parent=1 // pred_fallthru
      _
    // Predicated region
    $region58: #{tpu_custom_call.1} parent=1 // pred_check
      _
    $region59: #{tpu_custom_call.1} parent=1 // pred_check_branch
      %113 = sbr.rel (0) target = $region61
    $region60: #{tpu_custom_call.1} parent=1 // pred_region
      %114 = dma.done [#allocation12], 512
    $region61: #{tpu_custom_call.1} parent=1 // pred_fallthru
      _
    %v115 = vld [vmem:[#allocation2] sm:$0xff]
    %v116 = vld [vmem:[#allocation2 + $0x8] sm:$0xff]
    %v117 = vld [vmem:[#allocation5] sm:$0xff]
    %v118 = vld [vmem:[#allocation5 + $0x8] sm:$0xff]
    %v119 = vld [vmem:[#allocation7] sm:$0xff]
    %v120 = vld [vmem:[#allocation7 + $0x8] sm:$0xff]
    %v121 = vld [vmem:[#allocation8] sm:$0xff]
    %v122 = vld [vmem:[#allocation8 + $0x8] sm:$0xff]
    %v123 = vld [vmem:[#allocation8 + $0x10] sm:$0xff]
    %v124 = vld [vmem:[#allocation8 + $0x18] sm:$0xff]
    %v125 = vld [vmem:[%s4] sm:$0x1]
    %v127 = vlaneseq
    %v128 = vshrl.u32 %v127, 7
    %v129 = vsub.s32 0, %v128
    %v130 = vrot.slane %v125, %v129
    %vm132 = vcmask 261120
    %v134 = vsel %vm132, %v115, 0
    %v137 = vsel %vm132, %v116, 0
    %139 = vmatprep.subr.mxu0 0.0
    %140 = vmatpush1.msra.mxu0 %v121
    %141 = vmatprep.subr.mxu0 0.0
    %142 = vmatpush1.msra.mxu0 %v122
    %143 = vmatprep.subr.mxu0 0.0
    %144 = vmatpush1.msra.mxu0 %v123
    %145 = vmatprep.subr.mxu0 0.0
    %146 = vmatpush1.msra.mxu0 %v124
    %147 = vmatprep.subr.mxu0 0.0
    %148 = vmatpush1.msra.mxu0 0.0
    %149 = vmatprep.subr.mxu0 0.0
    %150 = vmatpush1.msra.mxu0 0.0
    %151 = vmatprep.subr.mxu0 0.0
    %152 = vmatpush1.msra.mxu0 0.0
    %153 = vmatprep.subr.mxu0 0.0
    %154 = vmatpush1.msra.mxu0 0.0
    %155 = vmatprep.subr.mxu0 0.0
    %156 = vmatpush1.msra.mxu0 0.0
    %157 = vmatprep.subr.mxu0 0.0
    %158 = vmatpush1.msra.mxu0 0.0
    %159 = vmatprep.subr.mxu0 0.0
    %160 = vmatpush1.msra.mxu0 0.0
    %161 = vmatprep.subr.mxu0 0.0
    %162 = vmatpush1.msra.mxu0 0.0
    %163 = vmatprep.subr.mxu0 0.0
    %164 = vmatpush1.msra.mxu0 0.0
    %165 = vmatprep.subr.mxu0 0.0
    %166 = vmatpush1.msra.mxu0 0.0
    %167 = vmatprep.subr.mxu0 0.0
    %168 = vmatpush1.msra.mxu0 0.0
    %169 = vmatprep.subr.mxu0 0.0
    %170 = vmatpush1.msra.mxu0 0.0
    %171 = vmatprep.subr.mxu0 0.0
    %172 = vmatpush1.msra.mxu0 0.0
    %173 = vmatprep.subr.mxu0 0.0
    %174 = vmatpush1.msra.mxu0 0.0
    %175 = vmatprep.subr.mxu0 0.0
    %176 = vmatpush1.msra.mxu0 0.0
    %177 = vmatprep.subr.mxu0 0.0
    %178 = vmatpush1.msra.mxu0 0.0
    %179 = vmatprep.subr.mxu0 0.0
    %180 = vmatpush1.msra.mxu0 0.0
    %181 = vmatprep.subr.mxu0 0.0
    %182 = vmatpush1.msra.mxu0 0.0
    %183 = vmatprep.subr.mxu0 0.0
    %184 = vmatpush1.msra.mxu0 0.0
    %185 = vmatprep.subr.mxu0 0.0
    %186 = vmatpush1.msra.mxu0 0.0
    %187 = vmatprep.subr.mxu0 0.0
    %188 = vmatpush1.msra.mxu0 0.0
    %189 = vmatprep.subr.mxu0 0.0
    %190 = vmatpush1.msra.mxu0 0.0
    %191 = vmatprep.subr.mxu0 0.0
    %192 = vmatpush1.msra.mxu0 0.0
    %193 = vmatprep.subr.mxu0 0.0
    %194 = vmatpush1.msra.mxu0 0.0
    %195 = vmatprep.subr.mxu0 0.0
    %196 = vmatpush1.msra.mxu0 0.0
    %197 = vmatprep.subr.mxu0 0.0
    %198 = vmatpush1.msra.mxu0 0.0
    %199 = vmatprep.subr.mxu0 0.0
    %200 = vmatpush1.msra.mxu0 0.0
    %201 = vmatprep.subr.mxu0 0.0
    %202 = vmatpush1.msra.mxu0 0.0
    %203 = vmatprep.mubr.f32.mxu0 0.0
    %204 = vmatmul.mubr.f32.gmra.mrb[0].mxu0 %v134
    %v205 = vpop.f32.mrb[0].mxu0
    %v206 = vadd.f32 %v130, %v205
    %v207 = vpop.f32.mrb[0].mxu0
    %208 = vmatprep.mubr.f32.mxu0 0.0
    %209 = vmatmul.mubr.f32.gmra.mrb[0].mxu0 %v137
    %v210 = vpop.f32.mrb[0].mxu0
    %v211 = vadd.f32 %v130, %v210
    %v212 = vpop.f32.mrb[0].mxu0
    %213 = vdwg.mxu0
    %v214 = vld [vmem:[#allocation10] sm:$0xff]
    %v215 = vld [vmem:[#allocation10 + $0x8] sm:$0xff]
    %v216 = vld [vmem:[#allocation10 + $0x10] sm:$0xff]
    %v217 = vld [vmem:[#allocation10 + $0x18] sm:$0xff]
    %v218 = vld [vmem:[%s6] sm:$0x1]
    %v220 = vlaneseq
    %v221 = vshrl.u32 %v220, 7
    %v222 = vsub.s32 0, %v221
    %v223 = vrot.slane %v218, %v222
    %v226 = vsel %vm132, %v117, 0
    %v229 = vsel %vm132, %v118, 0
    %231 = vmatprep.subr.mxu0 0.0
    %232 = vmatpush1.msra.mxu0 %v214
    %233 = vmatprep.subr.mxu0 0.0
    %234 = vmatpush1.msra.mxu0 %v215
    %235 = vmatprep.subr.mxu0 0.0
    %236 = vmatpush1.msra.mxu0 %v216
    %237 = vmatprep.subr.mxu0 0.0
    %238 = vmatpush1.msra.mxu0 %v217
    %239 = vmatprep.subr.mxu0 0.0
    %240 = vmatpush1.msra.mxu0 0.0
    %241 = vmatprep.subr.mxu0 0.0
    %242 = vmatpush1.msra.mxu0 0.0
    %243 = vmatprep.subr.mxu0 0.0
    %244 = vmatpush1.msra.mxu0 0.0
    %245 = vmatprep.subr.mxu0 0.0
    %246 = vmatpush1.msra.mxu0 0.0
    %247 = vmatprep.subr.mxu0 0.0
    %248 = vmatpush1.msra.mxu0 0.0
    %249 = vmatprep.subr.mxu0 0.0
    %250 = vmatpush1.msra.mxu0 0.0
    %251 = vmatprep.subr.mxu0 0.0
    %252 = vmatpush1.msra.mxu0 0.0
    %253 = vmatprep.subr.mxu0 0.0
    %254 = vmatpush1.msra.mxu0 0.0
    %255 = vmatprep.subr.mxu0 0.0
    %256 = vmatpush1.msra.mxu0 0.0
    %257 = vmatprep.subr.mxu0 0.0
    %258 = vmatpush1.msra.mxu0 0.0
    %259 = vmatprep.subr.mxu0 0.0
    %260 = vmatpush1.msra.mxu0 0.0
    %261 = vmatprep.subr.mxu0 0.0
    %262 = vmatpush1.msra.mxu0 0.0
    %263 = vmatprep.subr.mxu0 0.0
    %264 = vmatpush1.msra.mxu0 0.0
    %265 = vmatprep.subr.mxu0 0.0
    %266 = vmatpush1.msra.mxu0 0.0
    %267 = vmatprep.subr.mxu0 0.0
    %268 = vmatpush1.msra.mxu0 0.0
    %269 = vmatprep.subr.mxu0 0.0
    %270 = vmatpush1.msra.mxu0 0.0
    %271 = vmatprep.subr.mxu0 0.0
    %272 = vmatpush1.msra.mxu0 0.0
    %273 = vmatprep.subr.mxu0 0.0
    %274 = vmatpush1.msra.mxu0 0.0
    %275 = vmatprep.subr.mxu0 0.0
    %276 = vmatpush1.msra.mxu0 0.0
    %277 = vmatprep.subr.mxu0 0.0
    %278 = vmatpush1.msra.mxu0 0.0
    %279 = vmatprep.subr.mxu0 0.0
    %280 = vmatpush1.msra.mxu0 0.0
    %281 = vmatprep.subr.mxu0 0.0
    %282 = vmatpush1.msra.mxu0 0.0
    %283 = vmatprep.subr.mxu0 0.0
    %284 = vmatpush1.msra.mxu0 0.0
    %285 = vmatprep.subr.mxu0 0.0
    %286 = vmatpush1.msra.mxu0 0.0
    %287 = vmatprep.subr.mxu0 0.0
    %288 = vmatpush1.msra.mxu0 0.0
    %289 = vmatprep.subr.mxu0 0.0
    %290 = vmatpush1.msra.mxu0 0.0
    %291 = vmatprep.subr.mxu0 0.0
    %292 = vmatpush1.msra.mxu0 0.0
    %293 = vmatprep.subr.mxu0 0.0
    %294 = vmatpush1.msra.mxu0 0.0
    %295 = vmatprep.mubr.f32.mxu0 0.0
    %296 = vmatmul.mubr.f32.gmra.mrb[0].mxu0 %v226
    %v297 = vpop.f32.mrb[0].mxu0
    %v298 = vadd.f32 %v223, %v297
    %v299 = vpop.f32.mrb[0].mxu0
    %300 = vmatprep.mubr.f32.mxu0 0.0
    %301 = vmatmul.mubr.f32.gmra.mrb[0].mxu0 %v229
    %v302 = vpop.f32.mrb[0].mxu0
    %v303 = vadd.f32 %v223, %v302
    %v304 = vpop.f32.mrb[0].mxu0
    %305 = vdwg.mxu0
    %v306 = vld [vmem:[#allocation11] sm:$0xff]
    %v307 = vld [vmem:[#allocation11 + $0x8] sm:$0xff]
    %v308 = vld [vmem:[#allocation11 + $0x10] sm:$0xff]
    %v309 = vld [vmem:[#allocation11 + $0x18] sm:$0xff]
    %v310 = vld [vmem:[%s8] sm:$0x1]
    %v312 = vlaneseq
    %v313 = vshrl.u32 %v312, 7
    %v314 = vsub.s32 0, %v313
    %v315 = vrot.slane %v310, %v314
    %v318 = vsel %vm132, %v119, 0
    %v321 = vsel %vm132, %v120, 0
    %323 = vmatprep.subr.mxu0 0.0
    %324 = vmatpush1.msra.mxu0 %v306
    %325 = vmatprep.subr.mxu0 0.0
    %326 = vmatpush1.msra.mxu0 %v307
    %327 = vmatprep.subr.mxu0 0.0
    %328 = vmatpush1.msra.mxu0 %v308
    %329 = vmatprep.subr.mxu0 0.0
    %330 = vmatpush1.msra.mxu0 %v309
    %331 = vmatprep.subr.mxu0 0.0
    %332 = vmatpush1.msra.mxu0 0.0
    %333 = vmatprep.subr.mxu0 0.0
    %334 = vmatpush1.msra.mxu0 0.0
    %335 = vmatprep.subr.mxu0 0.0
    %336 = vmatpush1.msra.mxu0 0.0
    %337 = vmatprep.subr.mxu0 0.0
    %338 = vmatpush1.msra.mxu0 0.0
    %339 = vmatprep.subr.mxu0 0.0
    %340 = vmatpush1.msra.mxu0 0.0
    %341 = vmatprep.subr.mxu0 0.0
    %342 = vmatpush1.msra.mxu0 0.0
    %343 = vmatprep.subr.mxu0 0.0
    %344 = vmatpush1.msra.mxu0 0.0
    %345 = vmatprep.subr.mxu0 0.0
    %346 = vmatpush1.msra.mxu0 0.0
    %347 = vmatprep.subr.mxu0 0.0
    %348 = vmatpush1.msra.mxu0 0.0
    %349 = vmatprep.subr.mxu0 0.0
    %350 = vmatpush1.msra.mxu0 0.0
    %351 = vmatprep.subr.mxu0 0.0
    %352 = vmatpush1.msra.mxu0 0.0
    %353 = vmatprep.subr.mxu0 0.0
    %354 = vmatpush1.msra.mxu0 0.0
    %355 = vmatprep.subr.mxu0 0.0
    %356 = vmatpush1.msra.mxu0 0.0
    %357 = vmatprep.subr.mxu0 0.0
    %358 = vmatpush1.msra.mxu0 0.0
    %359 = vmatprep.subr.mxu0 0.0
    %360 = vmatpush1.msra.mxu0 0.0
    %361 = vmatprep.subr.mxu0 0.0
    %362 = vmatpush1.msra.mxu0 0.0
    %363 = vmatprep.subr.mxu0 0.0
    %364 = vmatpush1.msra.mxu0 0.0
    %365 = vmatprep.subr.mxu0 0.0
    %366 = vmatpush1.msra.mxu0 0.0
    %367 = vmatprep.subr.mxu0 0.0
    %368 = vmatpush1.msra.mxu0 0.0
    %369 = vmatprep.subr.mxu0 0.0
    %370 = vmatpush1.msra.mxu0 0.0
    %371 = vmatprep.subr.mxu0 0.0
    %372 = vmatpush1.msra.mxu0 0.0
    %373 = vmatprep.subr.mxu0 0.0
    %374 = vmatpush1.msra.mxu0 0.0
    %375 = vmatprep.subr.mxu0 0.0
    %376 = vmatpush1.msra.mxu0 0.0
    %377 = vmatprep.subr.mxu0 0.0
    %378 = vmatpush1.msra.mxu0 0.0
    %379 = vmatprep.subr.mxu0 0.0
    %380 = vmatpush1.msra.mxu0 0.0
    %381 = vmatprep.subr.mxu0 0.0
    %382 = vmatpush1.msra.mxu0 0.0
    %383 = vmatprep.subr.mxu0 0.0
    %384 = vmatpush1.msra.mxu0 0.0
    %385 = vmatprep.subr.mxu0 0.0
    %386 = vmatpush1.msra.mxu0 0.0
    %387 = vmatprep.mubr.f32.mxu0 0.0
    %388 = vmatmul.mubr.f32.gmra.mrb[0].mxu0 %v318
    %v389 = vpop.f32.mrb[0].mxu0
    %v390 = vadd.f32 %v315, %v389
    %v391 = vpop.f32.mrb[0].mxu0
    %392 = vmatprep.mubr.f32.mxu0 0.0
    %393 = vmatmul.mubr.f32.gmra.mrb[0].mxu0 %v321
    %v394 = vpop.f32.mrb[0].mxu0
    %v395 = vadd.f32 %v315, %v394
    %v396 = vpop.f32.mrb[0].mxu0
    %397 = vdwg.mxu0
    %v399 = vsel %vm132, %v206, 0
    %v402 = vsel %vm132, %v298, 0
    %404 = vmatprep.subr.mxu0 0.0
    %405 = vmatpush1.xpose.msra.mxu0 %v402
    %406 = vmatprep.subr.mxu0 0.0
    %407 = vmatpush1.xpose.msra.mxu0 0.0
    %408 = vmatprep.subr.mxu0 0.0
    %409 = vmatpush1.xpose.msra.mxu0 0.0
    %410 = vmatprep.subr.mxu0 0.0
    %411 = vmatpush1.xpose.msra.mxu0 0.0
    %412 = vmatprep.subr.mxu0 0.0
    %413 = vmatpush1.xpose.msra.mxu0 0.0
    %414 = vmatprep.subr.mxu0 0.0
    %415 = vmatpush1.xpose.msra.mxu0 0.0
    %416 = vmatprep.subr.mxu0 0.0
    %417 = vmatpush1.xpose.msra.mxu0 0.0
    %418 = vmatprep.subr.mxu0 0.0
    %419 = vmatpush1.xpose.msra.mxu0 0.0
    %420 = vmatprep.subr.mxu0 0.0
    %421 = vmatpush1.xpose.msra.mxu0 0.0
    %422 = vmatprep.subr.mxu0 0.0
    %423 = vmatpush1.xpose.msra.mxu0 0.0
    %424 = vmatprep.subr.mxu0 0.0
    %425 = vmatpush1.xpose.msra.mxu0 0.0
    %426 = vmatprep.subr.mxu0 0.0
    %427 = vmatpush1.xpose.msra.mxu0 0.0
    %428 = vmatprep.subr.mxu0 0.0
    %429 = vmatpush1.xpose.msra.mxu0 0.0
    %430 = vmatprep.subr.mxu0 0.0
    %431 = vmatpush1.xpose.msra.mxu0 0.0
    %432 = vmatprep.subr.mxu0 0.0
    %433 = vmatpush1.xpose.msra.mxu0 0.0
    %434 = vmatprep.subr.mxu0 0.0
    %435 = vmatpush1.xpose.msra.mxu0 0.0
    %436 = vmatprep.subr.mxu0 0.0
    %437 = vmatpush1.xpose.msra.mxu0 0.0
    %438 = vmatprep.subr.mxu0 0.0
    %439 = vmatpush1.xpose.msra.mxu0 0.0
    %440 = vmatprep.subr.mxu0 0.0
    %441 = vmatpush1.xpose.msra.mxu0 0.0
    %442 = vmatprep.subr.mxu0 0.0
    %443 = vmatpush1.xpose.msra.mxu0 0.0
    %444 = vmatprep.subr.mxu0 0.0
    %445 = vmatpush1.xpose.msra.mxu0 0.0
    %446 = vmatprep.subr.mxu0 0.0
    %447 = vmatpush1.xpose.msra.mxu0 0.0
    %448 = vmatprep.subr.mxu0 0.0
    %449 = vmatpush1.xpose.msra.mxu0 0.0
    %450 = vmatprep.subr.mxu0 0.0
    %451 = vmatpush1.xpose.msra.mxu0 0.0
    %452 = vmatprep.subr.mxu0 0.0
    %453 = vmatpush1.xpose.msra.mxu0 0.0
    %454 = vmatprep.subr.mxu0 0.0
    %455 = vmatpush1.xpose.msra.mxu0 0.0
    %456 = vmatprep.subr.mxu0 0.0
    %457 = vmatpush1.xpose.msra.mxu0 0.0
    %458 = vmatprep.subr.mxu0 0.0
    %459 = vmatpush1.xpose.msra.mxu0 0.0
    %460 = vmatprep.subr.mxu0 0.0
    %461 = vmatpush1.xpose.msra.mxu0 0.0
    %462 = vmatprep.subr.mxu0 0.0
    %463 = vmatpush1.xpose.msra.mxu0 0.0
    %464 = vmatprep.subr.mxu0 0.0
    %465 = vmatpush1.xpose.msra.mxu0 0.0
    %466 = vmatprep.subr.mxu0 0.0
    %467 = vmatpush1.xpose.msra.mxu0 0.0
    %468 = vmatprep.mubr.f32.mxu0 0.0
    %469 = vmatmul.mubr.f32.gmra.mrb[0].mxu0 %v399
    %v470 = vpop.f32.mrb[0].mxu0
    %v471 = vadd.f32 0.0, %v470
    %v472 = vpop.f32.mrb[0].mxu0
    %473 = vdwg.mxu0
    %v475 = vsel %vm132, %v211, 0
    %v478 = vsel %vm132, %v303, 0
    %480 = vmatprep.subr.mxu0 0.0
    %481 = vmatpush1.xpose.msra.mxu0 %v478
    %482 = vmatprep.subr.mxu0 0.0
    %483 = vmatpush1.xpose.msra.mxu0 0.0
    %484 = vmatprep.subr.mxu0 0.0
    %485 = vmatpush1.xpose.msra.mxu0 0.0
    %486 = vmatprep.subr.mxu0 0.0
    %487 = vmatpush1.xpose.msra.mxu0 0.0
    %488 = vmatprep.subr.mxu0 0.0
    %489 = vmatpush1.xpose.msra.mxu0 0.0
    %490 = vmatprep.subr.mxu0 0.0
    %491 = vmatpush1.xpose.msra.mxu0 0.0
    %492 = vmatprep.subr.mxu0 0.0
    %493 = vmatpush1.xpose.msra.mxu0 0.0
    %494 = vmatprep.subr.mxu0 0.0
    %495 = vmatpush1.xpose.msra.mxu0 0.0
    %496 = vmatprep.subr.mxu0 0.0
    %497 = vmatpush1.xpose.msra.mxu0 0.0
    %498 = vmatprep.subr.mxu0 0.0
    %499 = vmatpush1.xpose.msra.mxu0 0.0
    %500 = vmatprep.subr.mxu0 0.0
    %501 = vmatpush1.xpose.msra.mxu0 0.0
    %502 = vmatprep.subr.mxu0 0.0
    %503 = vmatpush1.xpose.msra.mxu0 0.0
    %504 = vmatprep.subr.mxu0 0.0
    %505 = vmatpush1.xpose.msra.mxu0 0.0
    %506 = vmatprep.subr.mxu0 0.0
    %507 = vmatpush1.xpose.msra.mxu0 0.0
    %508 = vmatprep.subr.mxu0 0.0
    %509 = vmatpush1.xpose.msra.mxu0 0.0
    %510 = vmatprep.subr.mxu0 0.0
    %511 = vmatpush1.xpose.msra.mxu0 0.0
    %512 = vmatprep.subr.mxu0 0.0
    %513 = vmatpush1.xpose.msra.mxu0 0.0
    %514 = vmatprep.subr.mxu0 0.0
    %515 = vmatpush1.xpose.msra.mxu0 0.0
    %516 = vmatprep.subr.mxu0 0.0
    %517 = vmatpush1.xpose.msra.mxu0 0.0
    %518 = vmatprep.subr.mxu0 0.0
    %519 = vmatpush1.xpose.msra.mxu0 0.0
    %520 = vmatprep.subr.mxu0 0.0
    %521 = vmatpush1.xpose.msra.mxu0 0.0
    %522 = vmatprep.subr.mxu0 0.0
    %523 = vmatpush1.xpose.msra.mxu0 0.0
    %524 = vmatprep.subr.mxu0 0.0
    %525 = vmatpush1.xpose.msra.mxu0 0.0
    %526 = vmatprep.subr.mxu0 0.0
    %527 = vmatpush1.xpose.msra.mxu0 0.0
    %528 = vmatprep.subr.mxu0 0.0
    %529 = vmatpush1.xpose.msra.mxu0 0.0
    %530 = vmatprep.subr.mxu0 0.0
    %531 = vmatpush1.xpose.msra.mxu0 0.0
    %532 = vmatprep.subr.mxu0 0.0
    %533 = vmatpush1.xpose.msra.mxu0 0.0
    %534 = vmatprep.subr.mxu0 0.0
    %535 = vmatpush1.xpose.msra.mxu0 0.0
    %536 = vmatprep.subr.mxu0 0.0
    %537 = vmatpush1.xpose.msra.mxu0 0.0
    %538 = vmatprep.subr.mxu0 0.0
    %539 = vmatpush1.xpose.msra.mxu0 0.0
    %540 = vmatprep.subr.mxu0 0.0
    %541 = vmatpush1.xpose.msra.mxu0 0.0
    %542 = vmatprep.subr.mxu0 0.0
    %543 = vmatpush1.xpose.msra.mxu0 0.0
    %544 = vmatprep.mubr.f32.mxu0 0.0
    %545 = vmatmul.mubr.f32.gmra.mrb[0].mxu0 %v475
    %v546 = vpop.f32.mrb[0].mxu0
    %v547 = vadd.f32 0.0, %v546
    %v548 = vpop.f32.mrb[0].mxu0
    %549 = vdwg.mxu0
    %vm550 = vcmask 64512
    %v551 = vsel %vm550, %v471, -inf
    %552 = vmax.xlane.f32.xlu0 %v551
    %v553 = vpop.xlane.xlu0 %552
    %v554 = vsel %vm550, %v547, -inf
    %555 = vmax.xlane.f32.xlu0 %v554
    %v556 = vpop.xlane.xlu0 %555
    %v557 = vsub.f32 %v471, %v553
    %v558 = vsub.f32 %v547, %v556
    %v559 = vmul.f32 %v557, 1.442695
    %v560 = vpow.pop %v559
    %v561 = vmul.f32 %v558, 1.442695
    %v562 = vpow.pop %v561
    %v563 = vsel %vm550, %v560, 0.0
    %564 = vadd.xlane.f32.xlu0 %v563
    %v565 = vpop.xlane.xlu0 %564
    %v566 = vsel %vm550, %v562, 0.0
    %567 = vadd.xlane.f32.xlu0 %v566
    %v568 = vpop.xlane.xlu0 %567
    %v569 = vrcp.pop %v565
    %v570 = vrcp.pop %v568
    %v571 = vmul.f32 %v560, %v569
    %v572 = vmul.f32 %v562, %v570
    %v574 = vsel %vm550, %v571, 0
    %576 = vmatprep.subr.mxu0 0.0
    %577 = vmatpush1.msra.mxu0 %v390
    %578 = vmatprep.subr.mxu0 0.0
    %579 = vmatpush1.msra.mxu0 0.0
    %580 = vmatprep.subr.mxu0 0.0
    %581 = vmatpush1.msra.mxu0 0.0
    %582 = vmatprep.subr.mxu0 0.0
    %583 = vmatpush1.msra.mxu0 0.0
    %584 = vmatprep.subr.mxu0 0.0
    %585 = vmatpush1.msra.mxu0 0.0
    %586 = vmatprep.subr.mxu0 0.0
    %587 = vmatpush1.msra.mxu0 0.0
    %588 = vmatprep.subr.mxu0 0.0
    %589 = vmatpush1.msra.mxu0 0.0
    %590 = vmatprep.subr.mxu0 0.0
    %591 = vmatpush1.msra.mxu0 0.0
    %592 = vmatprep.subr.mxu0 0.0
    %593 = vmatpush1.msra.mxu0 0.0
    %594 = vmatprep.subr.mxu0 0.0
    %595 = vmatpush1.msra.mxu0 0.0
    %596 = vmatprep.subr.mxu0 0.0
    %597 = vmatpush1.msra.mxu0 0.0
    %598 = vmatprep.subr.mxu0 0.0
    %599 = vmatpush1.msra.mxu0 0.0
    %600 = vmatprep.subr.mxu0 0.0
    %601 = vmatpush1.msra.mxu0 0.0
    %602 = vmatprep.subr.mxu0 0.0
    %603 = vmatpush1.msra.mxu0 0.0
    %604 = vmatprep.subr.mxu0 0.0
    %605 = vmatpush1.msra.mxu0 0.0
    %606 = vmatprep.subr.mxu0 0.0
    %607 = vmatpush1.msra.mxu0 0.0
    %608 = vmatprep.subr.mxu0 0.0
    %609 = vmatpush1.msra.mxu0 0.0
    %610 = vmatprep.subr.mxu0 0.0
    %611 = vmatpush1.msra.mxu0 0.0
    %612 = vmatprep.subr.mxu0 0.0
    %613 = vmatpush1.msra.mxu0 0.0
    %614 = vmatprep.subr.mxu0 0.0
    %615 = vmatpush1.msra.mxu0 0.0
    %616 = vmatprep.subr.mxu0 0.0
    %617 = vmatpush1.msra.mxu0 0.0
    %618 = vmatprep.subr.mxu0 0.0
    %619 = vmatpush1.msra.mxu0 0.0
    %620 = vmatprep.subr.mxu0 0.0
    %621 = vmatpush1.msra.mxu0 0.0
    %622 = vmatprep.subr.mxu0 0.0
    %623 = vmatpush1.msra.mxu0 0.0
    %624 = vmatprep.subr.mxu0 0.0
    %625 = vmatpush1.msra.mxu0 0.0
    %626 = vmatprep.subr.mxu0 0.0
    %627 = vmatpush1.msra.mxu0 0.0
    %628 = vmatprep.subr.mxu0 0.0
    %629 = vmatpush1.msra.mxu0 0.0
    %630 = vmatprep.subr.mxu0 0.0
    %631 = vmatpush1.msra.mxu0 0.0
    %632 = vmatprep.subr.mxu0 0.0
    %633 = vmatpush1.msra.mxu0 0.0
    %634 = vmatprep.subr.mxu0 0.0
    %635 = vmatpush1.msra.mxu0 0.0
    %636 = vmatprep.subr.mxu0 0.0
    %637 = vmatpush1.msra.mxu0 0.0
    %638 = vmatprep.subr.mxu0 0.0
    %639 = vmatpush1.msra.mxu0 0.0
    %640 = vmatprep.mubr.f32.mxu0 0.0
    %641 = vmatmul.mubr.f32.gmra.mrb[0].mxu0 %v574
    %v642 = vpop.f32.mrb[0].mxu0
    %v643 = vadd.f32 0.0, %v642
    %v644 = vpop.f32.mrb[0].mxu0
    %645 = vdwg.mxu0
    %v647 = vsel %vm550, %v572, 0
    %649 = vmatprep.subr.mxu0 0.0
    %650 = vmatpush1.msra.mxu0 %v395
    %651 = vmatprep.subr.mxu0 0.0
    %652 = vmatpush1.msra.mxu0 0.0
    %653 = vmatprep.subr.mxu0 0.0
    %654 = vmatpush1.msra.mxu0 0.0
    %655 = vmatprep.subr.mxu0 0.0
    %656 = vmatpush1.msra.mxu0 0.0
    %657 = vmatprep.subr.mxu0 0.0
    %658 = vmatpush1.msra.mxu0 0.0
    %659 = vmatprep.subr.mxu0 0.0
    %660 = vmatpush1.msra.mxu0 0.0
    %661 = vmatprep.subr.mxu0 0.0
    %662 = vmatpush1.msra.mxu0 0.0
    %663 = vmatprep.subr.mxu0 0.0
    %664 = vmatpush1.msra.mxu0 0.0
    %665 = vmatprep.subr.mxu0 0.0
    %666 = vmatpush1.msra.mxu0 0.0
    %667 = vmatprep.subr.mxu0 0.0
    %668 = vmatpush1.msra.mxu0 0.0
    %669 = vmatprep.subr.mxu0 0.0
    %670 = vmatpush1.msra.mxu0 0.0
    %671 = vmatprep.subr.mxu0 0.0
    %672 = vmatpush1.msra.mxu0 0.0
    %673 = vmatprep.subr.mxu0 0.0
    %674 = vmatpush1.msra.mxu0 0.0
    %675 = vmatprep.subr.mxu0 0.0
    %676 = vmatpush1.msra.mxu0 0.0
    %677 = vmatprep.subr.mxu0 0.0
    %678 = vmatpush1.msra.mxu0 0.0
    %679 = vmatprep.subr.mxu0 0.0
    %680 = vmatpush1.msra.mxu0 0.0
    %681 = vmatprep.subr.mxu0 0.0
    %682 = vmatpush1.msra.mxu0 0.0
    %683 = vmatprep.subr.mxu0 0.0
    %684 = vmatpush1.msra.mxu0 0.0
    %685 = vmatprep.subr.mxu0 0.0
    %686 = vmatpush1.msra.mxu0 0.0
    %687 = vmatprep.subr.mxu0 0.0
    %688 = vmatpush1.msra.mxu0 0.0
    %689 = vmatprep.subr.mxu0 0.0
    %690 = vmatpush1.msra.mxu0 0.0
    %691 = vmatprep.subr.mxu0 0.0
    %692 = vmatpush1.msra.mxu0 0.0
    %693 = vmatprep.subr.mxu0 0.0
    %694 = vmatpush1.msra.mxu0 0.0
    %695 = vmatprep.subr.mxu0 0.0
    %696 = vmatpush1.msra.mxu0 0.0
    %697 = vmatprep.subr.mxu0 0.0
    %698 = vmatpush1.msra.mxu0 0.0
    %699 = vmatprep.subr.mxu0 0.0
    %700 = vmatpush1.msra.mxu0 0.0
    %701 = vmatprep.subr.mxu0 0.0
    %702 = vmatpush1.msra.mxu0 0.0
    %703 = vmatprep.subr.mxu0 0.0
    %704 = vmatpush1.msra.mxu0 0.0
    %705 = vmatprep.subr.mxu0 0.0
    %706 = vmatpush1.msra.mxu0 0.0
    %707 = vmatprep.subr.mxu0 0.0
    %708 = vmatpush1.msra.mxu0 0.0
    %709 = vmatprep.subr.mxu0 0.0
    %710 = vmatpush1.msra.mxu0 0.0
    %711 = vmatprep.subr.mxu0 0.0
    %712 = vmatpush1.msra.mxu0 0.0
    %713 = vmatprep.mubr.f32.mxu0 0.0
    %714 = vmatmul.mubr.f32.gmra.mrb[0].mxu0 %v647
    %v715 = vpop.f32.mrb[0].mxu0
    %v716 = vadd.f32 0.0, %v715
    %v717 = vpop.f32.mrb[0].mxu0
    %718 = vdwg.mxu0
    %719 = vst.msk [vmem:[#allocation13] sm:$0xff] %vm132, %v643
    %720 = vst.msk [vmem:[#allocation13 + $0x8] sm:$0xff] %vm132, %v716
    // Predicated region
    $region62: #{tpu_custom_call.1} parent=1 // pred_check
      _
    $region63: #{tpu_custom_call.1} parent=1 // pred_check_branch
      %722 = sbr.rel (0) target = $region65
    $region64: #{tpu_custom_call.1} parent=1 // pred_region
      %s724 = ssub.s32 256, 256
      %725 = vsyncadd [#allocation4], %s724
      %s726 = sshll.u32 [#allocation13], 4
      %s727 = int_to_ptr.vmem [resolvable:$true] %s726
      %732 = dma.vmem_to_hbm [thread:$0]  %s727, 256, %s9, [#allocation4], 128, 128, 8
    $region65: #{tpu_custom_call.1} parent=1 // pred_fallthru
      _
    // Predicated region
    $region66: #{tpu_custom_call.1} parent=1 // pred_check
      _
    $region67: #{tpu_custom_call.1} parent=1 // pred_check_branch
      %734 = sbr.rel (0) target = $region69
    $region68: #{tpu_custom_call.1} parent=1 // pred_region
      %735 = dma.done [#allocation4], 256
    $region69: #{tpu_custom_call.1} parent=1 // pred_fallthru
      _
    %736 = vsyncpa [#allocation3], 1
    %737 = vsyncpa [#allocation6], 1
    %738 = vsyncpa [#allocation9], 1
    %739 = vsyncpa [#allocation12], 1
    %740 = vsyncpa [#allocation4], 1

</llo_original>
